<compile_context>
chip_gen: v7x
topology: tpu7x:2x2x1
jax: 0.10.0
libtpu: 0.0.40
codegen_flags: <defaults>
</compile_context>

<pallas_src>
import functools

import jax
import jax.numpy as jnp
from jax.experimental import pallas as pl
from jax.experimental.pallas import tpu as pltpu

_LANE = 128
_MIB = 1024 * 1024


def _round_up(x: int, m: int) -> int:
    return ((x + m - 1) // m) * m


@functools.lru_cache(maxsize=1)
def _vmem_budget_bytes() -> int:
    """Per-generation scoped-VMEM budget (headroom under physical VMEM)."""
    try:
        cap = int(pltpu.get_tpu_info().vmem_capacity_bytes)
    except Exception:  # pragma: no cover - older jax / non-TPU: assume small part
        cap = 64 * _MIB
    return 100 * _MIB if cap >= 128 * _MIB else 48 * _MIB


def _divisor_tiles(padded: int, preferred: int, align: int):
    """All `align`-multiple tile sizes <= preferred that divide `padded`, descending."""
    top = min(padded, (preferred // align) * align)
    cands = [t for t in range(top, align - 1, -align) if padded % t == 0]
    return cands or [align]


def _pick_m_tile(batch: int, preferred: int, sublane: int):
    """Batch tile: largest sublane-multiple <= preferred dividing the
    sublane-rounded batch (no padding beyond sublane alignment)."""
    m_pad = _round_up(batch, sublane)
    if m_pad <= preferred:
        return m_pad, m_pad
    top = (preferred // sublane) * sublane
    for t in range(top, sublane - 1, -sublane):
        if m_pad % t == 0:
            return t, m_pad
    return sublane, m_pad


# ----------------------------------------------------------------------------
# Kernels
# ----------------------------------------------------------------------------
def _linear_relu_kernel_kres(x_ref, w_ref, b_ref, o_ref):
    """K-resident schedule: full K strip in VMEM -> one MXU pass per output tile,
    bias+ReLU fused, no accumulator scratch / zero-init pass."""
    y = jnp.dot(x_ref[...].astype(w_ref.dtype), w_ref[...],
                preferred_element_type=jnp.float32)
    o_ref[...] = jnp.maximum(y + b_ref[...], 0.0).astype(o_ref.dtype)


def _linear_relu_kernel_ktiled(x_ref, w_ref, b_ref, o_ref, acc_ref):
    """General K-tiled schedule: f32 VMEM accumulator, overwrite at k==0
    (no zero-init pass), bias+ReLU in the K epilogue."""
    k = pl.program_id(2)
    part = jnp.dot(x_ref[...].astype(w_ref.dtype), w_ref[...],
                   preferred_element_type=jnp.float32)

    @pl.when(k == 0)
    def _():
        acc_ref[...] = part

    @pl.when(k != 0)
    def _():
        acc_ref[...] += part

    @pl.when(k == pl.num_programs(2) - 1)
    def _():
        o_ref[...] = jnp.maximum(acc_ref[...] + b_ref[...], 0.0).astype(o_ref.dtype)


# ----------------------------------------------------------------------------
# Host-side wrapper (hot path: only touches activations; W/b are pre-padded)
# ----------------------------------------------------------------------------
@functools.partial(jax.jit, static_argnames=("h_out",))
def _linear_relu(x, w_pad, b_pad, *, h_out):
    """Fused y = relu(x @ W + b) over the FULL batch in one pallas_call."""
    batch, h_in = x.shape
    k_pad, n_pad = w_pad.shape
    out_dtype = x.dtype

    x_bytes = jnp.dtype(x.dtype).itemsize
    w_bytes = jnp.dtype(w_pad.dtype).itemsize
    o_bytes = jnp.dtype(out_dtype).itemsize

    budget = _vmem_budget_bytes()
    big_vmem = budget >= 96 * _MIB
    pref_nk = 1024 if big_vmem else 512

    # M tile: sublane alignment depends on x's HBM dtype (8 f32 / 16 bf16 / 32 8-bit).
    sublane = 8 if x_bytes == 4 else (16 if x_bytes == 2 else 32)
    tm, m_pad = _pick_m_tile(batch, 256, sublane)

    n_cands = _divisor_tiles(n_pad, pref_nk, _LANE)
    k_cands = _divisor_tiles(k_pad, pref_nk, _LANE)

    def fits(tm_, tk_, tn_, with_acc):
        # double-buffered x / W / bias / out tiles (+ resident f32 accumulator)
        need = 2 * (tm_ * tk_ * x_bytes + tk_ * tn_ * w_bytes
                    + tm_ * tn_ * o_bytes + tn_ * 4)
        if with_acc:
            need += tm_ * tn_ * 4
        return need <= int(0.7 * budget)

    # Prefer K-resident: W strip DMA'd once per N tile, single MXU pass per tile.
    tn_kres = next((t for t in n_cands if fits(tm, k_pad, t, False)), None)

    # Pad the activations once (zero rows/cols are inert through matmul+bias+ReLU).
    if (m_pad, k_pad) != (batch, h_in):
        x_p = jnp.pad(x, ((0, m_pad - batch), (0, k_pad - h_in)))
    else:
        x_p = x

    cost = pl.CostEstimate(
        flops=2 * m_pad * n_pad * k_pad,
        transcendentals=0,
        bytes_accessed=(m_pad * k_pad * x_bytes + k_pad * n_pad * w_bytes
                        + n_pad * 4 + m_pad * n_pad * o_bytes),
    )

    if tn_kres is not None:
        tn = tn_kres
        # Guarantee >= 2 tiles on a parallel axis so both v7x TensorCores get work.
        if m_pad == tm and n_pad == tn and n_pad % (2 * _LANE) == 0:
            tn = n_pad // 2
        grid = (n_pad // tn, m_pad // tm)  # j outer, i inner: W resident per j
        out = pl.pallas_call(
            _linear_relu_kernel_kres,
            out_shape=jax.ShapeDtypeStruct((m_pad, n_pad), out_dtype),
            grid_spec=pltpu.PrefetchScalarGridSpec(
                num_scalar_prefetch=0,
                grid=grid,
                in_specs=[
                    pl.BlockSpec((tm, k_pad), lambda j, i: (i, 0)),   # x strip
                    pl.BlockSpec((k_pad, tn), lambda j, i: (0, j)),   # W strip
                    pl.BlockSpec((1, tn), lambda j, i: (0, j)),       # bias
                ],
                out_specs=pl.BlockSpec((tm, tn), lambda j, i: (i, j)),
            ),
            compiler_params=pltpu.CompilerParams(
                dimension_semantics=("parallel", "parallel"),
                vmem_limit_bytes=budget,
            ),
            cost_estimate=cost,
        )(x_p, w_pad, b_pad)
    else:
        # K-tiled fallback for very large H_in (full K strip would not fit VMEM).
        # TODO(synk): if xprof shows exposed W-DMA waits here, add
        # pipeline_mode=pl.Buffered(3) to the W BlockSpec.
        tn = next((t for t in n_cands if fits(tm, _LANE, t, True)), _LANE)
        tk = next((t for t in k_cands if fits(tm, t, tn, True)), _LANE)
        grid = (m_pad // tm, n_pad // tn, k_pad // tk)
        out = pl.pallas_call(
            _linear_relu_kernel_ktiled,
            out_shape=jax.ShapeDtypeStruct((m_pad, n_pad), out_dtype),
            grid_spec=pltpu.PrefetchScalarGridSpec(
                num_scalar_prefetch=0,
                grid=grid,
                in_specs=[
                    pl.BlockSpec((tm, tk), lambda i, j, k: (i, k)),
                    pl.BlockSpec((tk, tn), lambda i, j, k: (k, j)),
                    pl.BlockSpec((1, tn), lambda i, j, k: (0, j)),
                ],
                out_specs=pl.BlockSpec((tm, tn), lambda i, j, k: (i, j)),
                scratch_shapes=[pltpu.VMEM((tm, tn), jnp.float32)],
            ),
            compiler_params=pltpu.CompilerParams(
                dimension_semantics=("parallel", "parallel", "arbitrary"),
                vmem_limit_bytes=budget,
            ),
            cost_estimate=cost,
        )(x_p, w_pad, b_pad)

    if (m_pad, n_pad) != (batch, h_out):
        out = out[:batch, :h_out]
    return out


class MultiStreamModule:
    """JAX/Pallas analogue of ipex.cpu.runtime.MultiStreamModule.

    The wrapped model is Linear(H_in -> H_out) + ReLU whose hot path runs in a
    single fused, tiled Pallas kernel over the whole batch. "Streams" only
    determine how the output is sliced when concat_output=False.
    """

    def __init__(self, params, num_streams: int, concat_output: bool = True,
                 compute_dtype=jnp.bfloat16):
        w, b = params
        if b.ndim == 1:
            b = b.reshape(1, -1)
        assert w.ndim == 2 and b.shape == (1, w.shape[1]), \
            "expected W of shape [H_in, H_out] and bias of shape [1, H_out]"
        self.h_in, self.h_out = int(w.shape[0]), int(w.shape[1])
        self.num_streams = num_streams
        self.concat_output = concat_output

        # Hoisted out of the forward hot path: lane-pad W/b ONCE and pre-cast W
        # to the MXU compute dtype (bf16 default, f32 accumulation kept).
        # Pass compute_dtype=None for bit-exact f32 semantics.
        k_pad = _round_up(self.h_in, _LANE)
        n_pad = _round_up(self.h_out, _LANE)
        w_p = jnp.pad(w, ((0, k_pad - self.h_in), (0, n_pad - self.h_out)))
        if compute_dtype is not None:
            w_p = w_p.astype(compute_dtype)
        b_p = jnp.pad(b, ((0, 0), (0, n_pad - self.h_out))).astype(jnp.float32)
        self.w_pad = jax.device_put(w_p)
        self.b_pad = jax.device_put(b_p)
        # TODO(synk): CPUPool core-affinity pinning and async Task futures have no
        # TPU equivalent; streams are output slicing over one fused pallas_call.
        # TODO(synk): optional fp8 (v7x) / int8 (v5e/v6e) weight path not implemented.

    def _shard_sizes(self, batch: int):
        """Per-stream batch shard sizes, exactly as the PyTorch module computes them."""
        batch_per_instance = batch // self.num_streams
        if batch_per_instance >= 1:
            used_num_streams = self.num_streams
            extra = batch % self.num_streams
        else:
            batch_per_instance = 1
            used_num_streams = batch
            extra = 0
        return [batch_per_instance + (1 if j < extra else 0)
                for j in range(used_num_streams)]

    def forward(self, inputs):
        # Single fused kernel over the full batch (weights loaded once, MXU-sized
        # tiles) — semantically identical to running the model per stream shard.
        out = _linear_relu(inputs, self.w_pad, self.b_pad, h_out=self.h_out)

        if self.num_streams == 1:
            return out if self.concat_output else [out]
        if self.concat_output:
            return out

        # concat_output=False -> raw per-stream outputs with the original shard sizes.
        results_raw, start = [], 0
        for n in self._shard_sizes(inputs.shape[0]):
            results_raw.append(out[start:start + n])
            start += n
        return results_raw


if __name__ == "__main__":
    key = jax.random.PRNGKey(0)
    kx, kw, kb = jax.random.split(key, 3)

    batch, h_in, h_out = 16, 32, 32
    x = jax.random.normal(kx, (batch, h_in), jnp.float32)
    w = jax.random.normal(kw, (h_in, h_out), jnp.float32) * 0.1
    b = jax.random.normal(kb, (1, h_out), jnp.float32) * 0.1

    ref = jnp.maximum(
        jnp.dot(x, w, precision=jax.lax.Precision.HIGHEST) + b, 0.0)

    # 1 stream, f32 opt-out path (compute_dtype=None): near-exact vs reference.
    m1 = MultiStreamModule((w, b), num_streams=1, concat_output=True,
                           compute_dtype=None)
    out1 = jax.block_until_ready(m1.forward(x))
    assert out1.shape == (batch, h_out)
    assert jnp.allclose(out1, ref, atol=5e-3, rtol=5e-3)

    # Default bf16-MXU path (f32 accumulation): looser tolerance.
    tol = dict(atol=3e-2, rtol=3e-2)

    # 2 streams, concat -> same fused call, same concatenated result.
    m2 = MultiStreamModule((w, b), num_streams=2, concat_output=True)
    out2 = jax.block_until_ready(m2.forward(x))
    assert out2.shape == (batch, h_out)
    assert jnp.allclose(out2, ref, **tol)

    # 3 streams, remainder case (shards 6, 5, 5), concat output.
    m3 = MultiStreamModule((w, b), num_streams=3, concat_output=True)
    out3 = jax.block_until_ready(m3.forward(x))
    assert out3.shape == (batch, h_out)
    assert jnp.allclose(out3, ref, **tol)

    # concat_output=False -> raw per-stream outputs (6, 5, 5 rows).
    m3l = MultiStreamModule((w, b), num_streams=3, concat_output=False)
    outs = [jax.block_until_ready(o) for o in m3l.forward(x)]
    assert len(outs) == 3
    assert outs[0].shape == (6, h_out) and outs[1].shape == (5, h_out)
    assert outs[2].shape == (5, h_out)
    assert jnp.allclose(jnp.concatenate(outs, axis=0), ref, **tol)

    # num_streams > batch degenerate case: batch size-1 shards, list output.
    m_big = MultiStreamModule((w, b), num_streams=batch + 5, concat_output=False)
    outs_big = [jax.block_until_ready(o) for o in m_big.forward(x)]
    assert len(outs_big) == batch and all(o.shape == (1, h_out) for o in outs_big)
    assert jnp.allclose(jnp.concatenate(outs_big, axis=0), ref, **tol)

    print("KERNEL_OK")
</pallas_src>

<mosaic_0001>
module attributes {stable_mosaic.version = 11 : i64} {
  func.func @_linear_relu_kernel_kres(%arg0: i32, %arg1: i32, %arg2: memref<16x128xf32, #tpu.memory_space<vmem>>, %arg3: memref<128x128xf32, #tpu.memory_space<vmem>>, %arg4: memref<1x128xf32, #tpu.memory_space<vmem>>, %arg5: memref<16x128xf32, #tpu.memory_space<vmem>>) attributes {dimension_semantics = [#tpu.dimension_semantics<parallel>, #tpu.dimension_semantics<parallel>], iteration_bounds = array<i64: 1, 1>, scalar_prefetch = 0 : i64, scratch_operands = 0 : i64, tpu.core_type = #tpu.core_type<tc>, window_params = [{transform_indices = @transform_0, window_bounds = array<i64: 16, 128>}, {transform_indices = @transform_1, window_bounds = array<i64: 128, 128>}, {transform_indices = @transform_2, window_bounds = array<i64: 1, 128>}, {transform_indices = @transform_3, window_bounds = array<i64: 16, 128>}]} {
    %c0 = arith.constant 0 : index
    %c0_0 = arith.constant 0 : index
    %0 = vector.load %arg2[%c0, %c0_0] : memref<16x128xf32, #tpu.memory_space<vmem>>, vector<16x128xf32>
    %c0_1 = arith.constant 0 : index
    %c0_2 = arith.constant 0 : index
    %1 = vector.load %arg3[%c0_1, %c0_2] : memref<128x128xf32, #tpu.memory_space<vmem>>, vector<128x128xf32>
    %cst = arith.constant dense<0.000000e+00> : vector<16x128xf32>
    %2 = tpu.matmul %0, %1, %cst {dimension_numbers = #tpu.dot_dimension_numbers<[1], [0], [0], [1], [0, 0, 1, 1], [], []>} : vector<16x128xf32>, vector<128x128xf32>, vector<16x128xf32> -> vector<16x128xf32>
    %c0_3 = arith.constant 0 : index
    %c0_4 = arith.constant 0 : index
    %3 = vector.load %arg4[%c0_3, %c0_4] : memref<1x128xf32, #tpu.memory_space<vmem>>, vector<1x128xf32>
    %4 = vector.broadcast %3 : vector<1x128xf32> to vector<16x128xf32>
    %5 = arith.addf %2, %4 : vector<16x128xf32>
    %cst_5 = arith.constant 0.000000e+00 : f32
    %6 = vector.broadcast %cst_5 : f32 to vector<16x128xf32>
    %7 = arith.maximumf %5, %6 : vector<16x128xf32>
    %c0_6 = arith.constant 0 : index
    %c0_7 = arith.constant 0 : index
    %8 = vector.load %arg5[%c0_6, %c0_7] : memref<16x128xf32, #tpu.memory_space<vmem>>, vector<16x128xf32>
    tpu.vector_store %arg5[%c0_6, %c0_7], %7 {strides = array<i32>} : memref<16x128xf32, #tpu.memory_space<vmem>>, vector<16x128xf32>,
    return
  }
  func.func @transform_0(%arg0: i32, %arg1: i32) -> (i32, i32) {
    %c0_i32 = arith.constant 0 : i32
    %c0_i32_0 = arith.constant 0 : i32
    return %arg1, %c0_i32 : i32, i32
  }
  func.func @transform_1(%arg0: i32, %arg1: i32) -> (i32, i32) {
    %c0_i32 = arith.constant 0 : i32
    %c0_i32_0 = arith.constant 0 : i32
    return %c0_i32, %arg0 : i32, i32
  }
  func.func @transform_2(%arg0: i32, %arg1: i32) -> (i32, i32) {
    %c0_i32 = arith.constant 0 : i32
    %c0_i32_0 = arith.constant 0 : i32
    return %c0_i32, %arg0 : i32, i32
  }
  func.func @transform_3(%arg0: i32, %arg1: i32) -> (i32, i32) {
    %c0_i32 = arith.constant 0 : i32
    return %arg1, %arg0 : i32, i32
  }
}

</mosaic_0001>

<llo_original>
// kernel: _linear_relu.1
$region0: #{_linear_relu.1}
  #allocation0 [shape = 'u32[]', space=smem, size = 0x4, offset = 0x4, fixed_abs, tag = 'smem constant byte address 0x4 - core index']
  #allocation1 [shape = 'u32[144,128]{1,0:T(1,128)}', space=vmem, size = 0x12000, scoped, tag = 'internal scratch']
  %s0 = inlined_call_operand.vmem [shape: f32[16,128], index: 0, kind: input, shape index: {}]
  %s1 = inlined_call_operand.hbm [shape: f32[128,128], index: 1, kind: input, shape index: {}]
  %s2 = inlined_call_operand.vmem [shape: f32[1,128], index: 2, kind: input, shape index: {}]
  %s3 = inlined_call_operand.hbm [shape: f32[16,128], index: 3, kind: output, shape index: {}]
  %s4 = sld [smem:[#allocation0]]
  $region26: #{_linear_relu.1} parent=0
    _
  %s6 = ssub.s32 1, %s4
  %s7 = scalar_select 0, %s6, %s4
  $region1: #{_linear_relu.1} parent=0
    #allocation2 [shape = 'u8[65536]{0}', space=vmem, size = 0x10000, scoped, tag = 'input window, operand 1, single buffered']
    #allocation3 [shape = 's32[1]{0}', space=sflag, size = 0x4, scoped, tag = 'scoped memory for _linear_relu.1']
    #allocation4 [shape = 's32[1]{0}', space=sflag, size = 0x4, scoped, tag = 'scoped memory for _linear_relu.1']
    #allocation5 [shape = 'u8[8192]{0}', space=vmem, size = 0x2000, scoped, tag = 'output window, operand 0, single buffered']
    %8 = vsyncpa [#allocation3], 0
    %9 = vsyncpa [#allocation4], 0
    // Predicated region
    $region2: #{_linear_relu.1} parent=1 // pred_check
      _
    $region3: #{_linear_relu.1} parent=1 // pred_check_branch
      %11 = sbr.rel (0) target = $region5
    $region4: #{_linear_relu.1} parent=1 // pred_region
      _
    $region5: #{_linear_relu.1} parent=1 // pred_fallthru
      _
    // Predicated region
    $region6: #{_linear_relu.1} parent=1 // pred_check
      _
    $region7: #{_linear_relu.1} parent=1 // pred_check_branch
      %13 = sbr.rel (0) target = $region9
    $region8: #{_linear_relu.1} parent=1 // pred_region
      %s15 = ssub.s32 2048, 2048
      %16 = vsyncadd [#allocation3], %s15
      %s17 = sshll.u32 [#allocation2], 4
      %s18 = int_to_ptr.vmem [resolvable:$true] %s17
      %23 = dma.hbm_to_vmem [thread:$0]  %s1, 2048, %s18, [#allocation3], 128, 128, 8
    $region9: #{_linear_relu.1} parent=1 // pred_fallthru
      _
    // Predicated region
    $region10: #{_linear_relu.1} parent=1 // pred_check
      _
    $region11: #{_linear_relu.1} parent=1 // pred_check_branch
      %25 = sbr.rel (0) target = $region13
    $region12: #{_linear_relu.1} parent=1 // pred_region
      _
    $region13: #{_linear_relu.1} parent=1 // pred_fallthru
      _
    // Predicated region
    $region14: #{_linear_relu.1} parent=1 // pred_check
      _
    $region15: #{_linear_relu.1} parent=1 // pred_check_branch
      %27 = sbr.rel (0) target = $region17
    $region16: #{_linear_relu.1} parent=1 // pred_region
      %28 = dma.done [#allocation3], 2048
    $region17: #{_linear_relu.1} parent=1 // pred_fallthru
      _
    %v29 = vld [vmem:[%s0] sm:$0xff]
    %v30 = vld [vmem:[%s0 + $0x8] sm:$0xff]
    %v31 = vld [vmem:[#allocation2] sm:$0xff]
    %v32 = vld [vmem:[#allocation2 + $0x8] sm:$0xff]
    %v33 = vld [vmem:[#allocation2 + $0x10] sm:$0xff]
    %v34 = vld [vmem:[#allocation2 + $0x18] sm:$0xff]
    %v35 = vld [vmem:[#allocation2 + $0x20] sm:$0xff]
    %v36 = vld [vmem:[#allocation2 + $0x28] sm:$0xff]
    %v37 = vld [vmem:[#allocation2 + $0x30] sm:$0xff]
    %v38 = vld [vmem:[#allocation2 + $0x38] sm:$0xff]
    %v39 = vld [vmem:[#allocation2 + $0x40] sm:$0xff]
    %v40 = vld [vmem:[#allocation2 + $0x48] sm:$0xff]
    %v41 = vld [vmem:[#allocation2 + $0x50] sm:$0xff]
    %v42 = vld [vmem:[#allocation2 + $0x58] sm:$0xff]
    %v43 = vld [vmem:[#allocation2 + $0x60] sm:$0xff]
    %v44 = vld [vmem:[#allocation2 + $0x68] sm:$0xff]
    %v45 = vld [vmem:[#allocation2 + $0x70] sm:$0xff]
    %v46 = vld [vmem:[#allocation2 + $0x78] sm:$0xff]
    %v47 = vld [vmem:[%s2] sm:$0x1]
    %v49 = vlaneseq
    %v50 = vshrl.u32 %v49, 7
    %v51 = vsub.s32 0, %v50
    %v52 = vrot.slane %v47, %v51
    %54 = vmatprep.subr.mxu0 0.0
    %55 = vmatpush1.msra.mxu0 %v31
    %56 = vmatprep.subr.mxu0 0.0
    %57 = vmatpush1.msra.mxu0 %v32
    %58 = vmatprep.subr.mxu0 0.0
    %59 = vmatpush1.msra.mxu0 %v33
    %60 = vmatprep.subr.mxu0 0.0
    %61 = vmatpush1.msra.mxu0 %v34
    %62 = vmatprep.subr.mxu0 0.0
    %63 = vmatpush1.msra.mxu0 %v35
    %64 = vmatprep.subr.mxu0 0.0
    %65 = vmatpush1.msra.mxu0 %v36
    %66 = vmatprep.subr.mxu0 0.0
    %67 = vmatpush1.msra.mxu0 %v37
    %68 = vmatprep.subr.mxu0 0.0
    %69 = vmatpush1.msra.mxu0 %v38
    %70 = vmatprep.subr.mxu0 0.0
    %71 = vmatpush1.msra.mxu0 %v39
    %72 = vmatprep.subr.mxu0 0.0
    %73 = vmatpush1.msra.mxu0 %v40
    %74 = vmatprep.subr.mxu0 0.0
    %75 = vmatpush1.msra.mxu0 %v41
    %76 = vmatprep.subr.mxu0 0.0
    %77 = vmatpush1.msra.mxu0 %v42
    %78 = vmatprep.subr.mxu0 0.0
    %79 = vmatpush1.msra.mxu0 %v43
    %80 = vmatprep.subr.mxu0 0.0
    %81 = vmatpush1.msra.mxu0 %v44
    %82 = vmatprep.subr.mxu0 0.0
    %83 = vmatpush1.msra.mxu0 %v45
    %84 = vmatprep.subr.mxu0 0.0
    %85 = vmatpush1.msra.mxu0 %v46
    %86 = vmatprep.subr.mxu0 0.0
    %87 = vmatpush1.msra.mxu0 0.0
    %88 = vmatprep.subr.mxu0 0.0
    %89 = vmatpush1.msra.mxu0 0.0
    %90 = vmatprep.subr.mxu0 0.0
    %91 = vmatpush1.msra.mxu0 0.0
    %92 = vmatprep.subr.mxu0 0.0
    %93 = vmatpush1.msra.mxu0 0.0
    %94 = vmatprep.subr.mxu0 0.0
    %95 = vmatpush1.msra.mxu0 0.0
    %96 = vmatprep.subr.mxu0 0.0
    %97 = vmatpush1.msra.mxu0 0.0
    %98 = vmatprep.subr.mxu0 0.0
    %99 = vmatpush1.msra.mxu0 0.0
    %100 = vmatprep.subr.mxu0 0.0
    %101 = vmatpush1.msra.mxu0 0.0
    %102 = vmatprep.subr.mxu0 0.0
    %103 = vmatpush1.msra.mxu0 0.0
    %104 = vmatprep.subr.mxu0 0.0
    %105 = vmatpush1.msra.mxu0 0.0
    %106 = vmatprep.subr.mxu0 0.0
    %107 = vmatpush1.msra.mxu0 0.0
    %108 = vmatprep.subr.mxu0 0.0
    %109 = vmatpush1.msra.mxu0 0.0
    %110 = vmatprep.subr.mxu0 0.0
    %111 = vmatpush1.msra.mxu0 0.0
    %112 = vmatprep.subr.mxu0 0.0
    %113 = vmatpush1.msra.mxu0 0.0
    %114 = vmatprep.subr.mxu0 0.0
    %115 = vmatpush1.msra.mxu0 0.0
    %116 = vmatprep.subr.mxu0 0.0
    %117 = vmatpush1.msra.mxu0 0.0
    %118 = vmatprep.mubr.f32.mxu0 0.0
    %119 = vmatmul.mubr.f32.gmra.mrb[0].mxu0 %v29
    %v120 = vpop.f32.mrb[0].mxu0
    %v121 = vadd.f32 %v52, %v120
    %v122 = vpop.f32.mrb[0].mxu0
    %123 = vmatprep.mubr.f32.mxu0 0.0
    %124 = vmatmul.mubr.f32.gmra.mrb[0].mxu0 %v30
    %v125 = vpop.f32.mrb[0].mxu0
    %v126 = vadd.f32 %v52, %v125
    %v127 = vpop.f32.mrb[0].mxu0
    %128 = vdwg.mxu0
    %v129 = vmax.f32 %v121, 0.0
    %v130 = vmax.f32 %v126, 0.0
    %131 = vst [vmem:[#allocation5] sm:$0xff] %v129
    %132 = vst [vmem:[#allocation5 + $0x8] sm:$0xff] %v130
    // Predicated region
    $region18: #{_linear_relu.1} parent=1 // pred_check
      _
    $region19: #{_linear_relu.1} parent=1 // pred_check_branch
      %134 = sbr.rel (0) target = $region21
    $region20: #{_linear_relu.1} parent=1 // pred_region
      %s136 = ssub.s32 256, 256
      %137 = vsyncadd [#allocation4], %s136
      %s138 = sshll.u32 [#allocation5], 4
      %s139 = int_to_ptr.vmem [resolvable:$true] %s138
      %144 = dma.vmem_to_hbm [thread:$0]  %s139, 256, %s3, [#allocation4], 128, 128, 8
    $region21: #{_linear_relu.1} parent=1 // pred_fallthru
      _
    // Predicated region
    $region22: #{_linear_relu.1} parent=1 // pred_check
      _
    $region23: #{_linear_relu.1} parent=1 // pred_check_branch
      %146 = sbr.rel (0) target = $region25
    $region24: #{_linear_relu.1} parent=1 // pred_region
      %147 = dma.done [#allocation4], 256
    $region25: #{_linear_relu.1} parent=1 // pred_fallthru
      _
    %148 = vsyncpa [#allocation3], 1
    %149 = vsyncpa [#allocation4], 1

</llo_original>
